<compile_context>
chip_gen: v7x
topology: tpu7x:2x2x1
jax: 0.10.0
libtpu: 0.0.40
codegen_flags: <defaults>
</compile_context>

<pallas_src>
import jax
import jax.numpy as jnp
from jax import lax
from jax.experimental import pallas as pl
from jax.experimental.pallas import tpu as pltpu

BN_EPS = 1e-5


def _round_up(x, m):
    return (x + m - 1) // m * m


def _vmem_limit_bytes():
    """Generation-aware scoped-VMEM request (v7x: 64 MiB/TC, v5e/v6e: 128 MiB)."""
    try:
        cap = int(pltpu.get_tpu_info().vmem_capacity_bytes)
    except Exception:
        cap = 64 * 1024 * 1024          # conservative fallback (v7x per-TC VMEM)
    return min(cap * 3 // 4, 96 * 1024 * 1024)


def _pick_tile_m(M, K, OC, max_tile, budget):
    """Rows per tile. Counts dbl-buffered bf16 patch tile, dbl-buffered f32 output
    tile, in-kernel f32/bf16 activation temporaries, and the resident weight."""
    per_row = 2 * (2 * K) + 2 * (4 * OC) + (4 * OC + 2 * OC) + 32
    fixed = 2 * (2 * K * OC) + (1 << 16)            # weight (dbl-buffered) + slack
    tile = min(max_tile, max(8, (budget - fixed) // max(per_row, 1)))
    tile = min(tile, _round_up(M, 8))
    return max(8, (tile // 8) * 8)


# ---------------- phase 1: per-tile channel sum / sum-of-squares -------------
def _conv_stats_kernel(p_ref, w_ref, sum_ref, sq_ref):
    # p_ref: [TILE_M, Kp] bf16 patches; w_ref: [Kp, OC] bf16 (index_map -> (0,0)).
    # sum_ref / sq_ref: [1, 1, OC] f32 per-tile partial statistics.
    y = jnp.dot(p_ref[...], w_ref[...], preferred_element_type=jnp.float32)
    yb = y.astype(jnp.bfloat16)
    ones = jnp.ones((1, yb.shape[0]), jnp.bfloat16)
    # Channel reductions on the MXU (f32 accumulation), not the VPU/XLU.
    sum_ref[...] = jnp.dot(ones, yb, preferred_element_type=jnp.float32)[None]
    sq_ref[...] = jnp.dot(ones, yb * yb, preferred_element_type=jnp.float32)[None]


# ---------------- phase 2: recompute conv matmul + BN affine + ReLU ----------
def _conv_bn_relu_kernel(p_ref, w_ref, scale_ref, shift_ref, o_ref):
    # p_ref: [TILE_M, Kp] bf16; w_ref: [Kp, OC] bf16; scale/shift: [1, OC] f32.
    y = jnp.dot(p_ref[...], w_ref[...], preferred_element_type=jnp.float32)
    o_ref[...] = jnp.maximum(y * scale_ref[...] + shift_ref[...], 0.0)


def con_bn_relu_2d(x, weight, bias, gamma, beta, *, stride=1, padding=0,
                   max_tile_m=1024):
    """x: [N, C, H, W] (NCHW). weight: [OC, C, KH, KW] (PyTorch OIHW). Returns NCHW."""
    # Conv bias is a per-channel constant; training-mode BatchNorm subtracts the
    # batch mean, which cancels it exactly -> drop it.
    del bias

    N, C, H, W = x.shape
    OC, _, KH, KW = weight.shape
    if padding:
        x = jnp.pad(x, ((0, 0), (0, 0), (padding, padding), (padding, padding)))
        H += 2 * padding
        W += 2 * padding
    OH = (H - KH) // stride + 1
    OW = (W - KW) // stride + 1
    K = C * KH * KW
    M = N * OH * OW

    # --- glue: NHWC bf16 im2col (lane-minor C), pure slices/stack ---
    # TODO(synk): patch extraction is still materialized by XLA; fusing it into
    # the kernel (manual DMA of shifted input rows + per-tap MXU accumulation)
    # is the remaining HBM-traffic lever.
    x_b = jnp.transpose(x, (0, 2, 3, 1)).astype(jnp.bfloat16)      # [N, H, W, C]
    slabs = []
    for kh in range(KH):
        for kw in range(KW):
            slabs.append(
                x_b[:, kh:kh + stride * OH:stride, kw:kw + stride * OW:stride, :])
    cols = jnp.stack(slabs, axis=3).reshape(M, K)                  # (tap, c) minor

    # weight OIHW -> [KH, KW, C, OC] -> [K, OC]  (matches cols' (kh,kw,c) order)
    wmat = jnp.transpose(weight, (2, 3, 1, 0)).reshape(K, OC).astype(jnp.bfloat16)

    # Lane-pad K only when it is nearly free in HBM bytes (<= 12.5% overhead).
    Kp = _round_up(K, 128)
    if Kp * 8 > K * 9:
        Kp = K

    vmem_limit = _vmem_limit_bytes()
    tile_m = _pick_tile_m(M, Kp, OC, max_tile_m, vmem_limit // 2)
    m_pad = _round_up(M, tile_m)
    num_tiles = m_pad // tile_m

    cols_p = jnp.pad(cols, ((0, m_pad - M), (0, Kp - K)))
    wmat_p = jnp.pad(wmat, ((0, Kp - K), (0, 0)))

    cparams = pltpu.CompilerParams(dimension_semantics=("parallel",),
                                   vmem_limit_bytes=vmem_limit)

    # --- phase 1: per-tile channel statistics (no activation written to HBM) ---
    part_sum, part_sq = pl.pallas_call(
        _conv_stats_kernel,
        out_shape=(jax.ShapeDtypeStruct((num_tiles, 1, OC), jnp.float32),
                   jax.ShapeDtypeStruct((num_tiles, 1, OC), jnp.float32)),
        grid=(num_tiles,),
        in_specs=[
            pl.BlockSpec((tile_m, Kp), lambda i: (i, 0)),
            pl.BlockSpec((Kp, OC), lambda i: (0, 0)),
        ],
        out_specs=(
            pl.BlockSpec((1, 1, OC), lambda i: (i, 0, 0)),
            pl.BlockSpec((1, 1, OC), lambda i: (i, 0, 0)),
        ),
        compiler_params=cparams,
    )(cols_p, wmat_p)

    # --- tiny glue: fold BN into one scale/shift pair ---
    # Padded rows of cols are all-zero -> contribute 0 to both partials, so
    # dividing by the true M gives exact biased batch statistics (training mode).
    # TODO(synk): single-pass E[y^2]-E[y]^2 can cancel for huge batches with
    # |mean| >> std; a pilot-mean shift would be more robust.
    inv_m = 1.0 / jnp.float32(M)
    mean = part_sum.sum(axis=0) * inv_m                             # [1, OC]
    var = jnp.maximum(part_sq.sum(axis=0) * inv_m - mean * mean, 0.0)
    scale = gamma.astype(jnp.float32).reshape(1, OC) * lax.rsqrt(var + BN_EPS)
    shift = beta.astype(jnp.float32).reshape(1, OC) - mean * scale

    # --- phase 2: recompute matmul + BN + ReLU, megacore-parallel over tiles ---
    out_flat = pl.pallas_call(
        _conv_bn_relu_kernel,
        out_shape=jax.ShapeDtypeStruct((m_pad, OC), jnp.float32),
        grid=(num_tiles,),
        in_specs=[
            pl.BlockSpec((tile_m, Kp), lambda i: (i, 0)),
            pl.BlockSpec((Kp, OC), lambda i: (0, 0)),
            pl.BlockSpec((1, OC), lambda i: (0, 0)),
            pl.BlockSpec((1, OC), lambda i: (0, 0)),
        ],
        out_specs=pl.BlockSpec((tile_m, OC), lambda i: (i, 0)),
        compiler_params=cparams,
    )(cols_p, wmat_p, scale, shift)

    # Back to NCHW (pure layout plumbing; avoidable if the surrounding net is NHWC).
    out = out_flat[:M].reshape(N, OH, OW, OC)
    return jnp.transpose(out, (0, 3, 1, 2))


def _reference(x, weight, bias, gamma, beta):
    OC = weight.shape[0]
    y = lax.conv_general_dilated(
        x, weight, window_strides=(1, 1), padding="VALID",
        dimension_numbers=("NCHW", "OIHW", "NCHW"))
    y = y + bias.reshape(1, OC, 1, 1)
    mean = y.mean(axis=(0, 2, 3), keepdims=True)
    var = jnp.square(y - mean).mean(axis=(0, 2, 3), keepdims=True)
    y = (y - mean) / jnp.sqrt(var + BN_EPS)
    y = y * gamma.reshape(1, OC, 1, 1) + beta.reshape(1, OC, 1, 1)
    return jnp.maximum(y, 0.0)


if __name__ == "__main__":
    # Small synthetic config (nn.Conv2d needs a 2-tuple kernel; the module's
    # default (51, 3, 3) is invalid for Conv2d, so we use a 3x3 kernel).
    N, C, H, W = 2, 4, 16, 16
    OC, KH, KW = 8, 3, 3

    key = jax.random.PRNGKey(0)
    kx, kw_, kb = jax.random.split(key, 3)
    x = jax.random.normal(kx, (N, C, H, W), dtype=jnp.float32)

    fan_in = C * KH * KW
    bound = 1.0 / (fan_in ** 0.5)
    weight = jax.random.uniform(kw_, (OC, C, KH, KW), jnp.float32, -bound, bound)
    bias = jax.random.uniform(kb, (OC,), jnp.float32, -bound, bound)
    gamma = jnp.ones((OC,), jnp.float32)   # BatchNorm2d default weight
    beta = jnp.zeros((OC,), jnp.float32)   # BatchNorm2d default bias

    fwd = jax.jit(con_bn_relu_2d,
                  static_argnames=("stride", "padding", "max_tile_m"))
    # max_tile_m=256 at this toy size exercises the multi-tile partial-stats and
    # zero-row M-padding paths (M=392 -> 2 tiles of 256). Real shapes should use
    # the default (>= 512 rows per tile).
    out = jax.block_until_ready(
        fwd(x, weight, bias, gamma, beta, stride=1, padding=0, max_tile_m=256))

    ref = _reference(x, weight, bias, gamma, beta)
    assert out.shape == (N, OC, H - KH + 1, W - KW + 1)
    # bf16 MXU inputs (f32 accumulation / statistics) -> bf16-level tolerance.
    max_err = float(jnp.abs(out - ref).max())
    assert jnp.allclose(out, ref, atol=3e-2, rtol=3e-2), max_err

    print("KERNEL_OK")
</pallas_src>

<mosaic_0001>
module attributes {stable_mosaic.version = 11 : i64} {
  func.func @_conv_stats_kernel(%arg0: i32, %arg1: memref<256x36xbf16, #tpu.memory_space<vmem>>, %arg2: memref<36x8xbf16, #tpu.memory_space<vmem>>, %arg3: memref<1x1x8xf32, #tpu.memory_space<vmem>>, %arg4: memref<1x1x8xf32, #tpu.memory_space<vmem>>) attributes {dimension_semantics = [#tpu.dimension_semantics<parallel>], iteration_bounds = array<i64: 2>, scalar_prefetch = 0 : i64, scratch_operands = 0 : i64, tpu.core_type = #tpu.core_type<tc>, window_params = [{transform_indices = @transform_0, window_bounds = array<i64: 256, 36>}, {pipeline_mode = #tpu.pipeline_mode<synchronous>, transform_indices = @transform_1, window_bounds = array<i64: 36, 8>}, {transform_indices = @transform_2, window_bounds = array<i64: 1, 1, 8>}, {transform_indices = @transform_3, window_bounds = array<i64: 1, 1, 8>}]} {
    %c0 = arith.constant 0 : index
    %c0_0 = arith.constant 0 : index
    %0 = vector.load %arg1[%c0, %c0_0] : memref<256x36xbf16, #tpu.memory_space<vmem>>, vector<256x36xbf16>
    %c0_1 = arith.constant 0 : index
    %c0_2 = arith.constant 0 : index
    %1 = vector.load %arg2[%c0_1, %c0_2] : memref<36x8xbf16, #tpu.memory_space<vmem>>, vector<36x8xbf16>
    %cst = arith.constant dense<0.000000e+00> : vector<256x8xf32>
    %2 = tpu.matmul %0, %1, %cst {dimension_numbers = #tpu.dot_dimension_numbers<[1], [0], [0], [1], [0, 0, 1, 1], [], []>} : vector<256x36xbf16>, vector<36x8xbf16>, vector<256x8xf32> -> vector<256x8xf32>
    %3 = arith.truncf %2 : vector<256x8xf32> to vector<256x8xbf16>
    %cst_3 = arith.constant 1.000000e+00 : bf16
    %4 = vector.broadcast %cst_3 : bf16 to vector<1x256xbf16>
    %cst_4 = arith.constant dense<0.000000e+00> : vector<1x8xf32>
    %5 = tpu.matmul %4, %3, %cst_4 {dimension_numbers = #tpu.dot_dimension_numbers<[1], [0], [0], [1], [0, 0, 1, 1], [], []>} : vector<1x256xbf16>, vector<256x8xbf16>, vector<1x8xf32> -> vector<1x8xf32>
    %6 = vector.shape_cast %5 : vector<1x8xf32> to vector<1x1x8xf32>
    %c0_5 = arith.constant 0 : index
    %c0_6 = arith.constant 0 : index
    %c0_7 = arith.constant 0 : index
    %7 = vector.load %arg3[%c0_5, %c0_6, %c0_7] : memref<1x1x8xf32, #tpu.memory_space<vmem>>, vector<1x1x8xf32>
    tpu.vector_store %arg3[%c0_5, %c0_6, %c0_7], %6 {strides = array<i32>} : memref<1x1x8xf32, #tpu.memory_space<vmem>>, vector<1x1x8xf32>,
    %8 = arith.mulf %3, %3 : vector<256x8xbf16>
    %cst_8 = arith.constant dense<0.000000e+00> : vector<1x8xf32>
    %9 = tpu.matmul %4, %8, %cst_8 {dimension_numbers = #tpu.dot_dimension_numbers<[1], [0], [0], [1], [0, 0, 1, 1], [], []>} : vector<1x256xbf16>, vector<256x8xbf16>, vector<1x8xf32> -> vector<1x8xf32>
    %10 = vector.shape_cast %9 : vector<1x8xf32> to vector<1x1x8xf32>
    %c0_9 = arith.constant 0 : index
    %c0_10 = arith.constant 0 : index
    %c0_11 = arith.constant 0 : index
    %11 = vector.load %arg4[%c0_9, %c0_10, %c0_11] : memref<1x1x8xf32, #tpu.memory_space<vmem>>, vector<1x1x8xf32>
    tpu.vector_store %arg4[%c0_9, %c0_10, %c0_11], %10 {strides = array<i32>} : memref<1x1x8xf32, #tpu.memory_space<vmem>>, vector<1x1x8xf32>,
    return
  }
  func.func @transform_0(%arg0: i32) -> (i32, i32) {
    %c0_i32 = arith.constant 0 : i32
    %c0_i32_0 = arith.constant 0 : i32
    return %arg0, %c0_i32 : i32, i32
  }
  func.func @transform_1(%arg0: i32) -> (i32, i32) {
    %c0_i32 = arith.constant 0 : i32
    %c0_i32_0 = arith.constant 0 : i32
    %c0_i32_1 = arith.constant 0 : i32
    return %c0_i32, %c0_i32_0 : i32, i32
  }
  func.func @transform_2(%arg0: i32) -> (i32, i32, i32) {
    %c0_i32 = arith.constant 0 : i32
    %c0_i32_0 = arith.constant 0 : i32
    %c0_i32_1 = arith.constant 0 : i32
    return %arg0, %c0_i32, %c0_i32_0 : i32, i32, i32
  }
  func.func @transform_3(%arg0: i32) -> (i32, i32, i32) {
    %c0_i32 = arith.constant 0 : i32
    %c0_i32_0 = arith.constant 0 : i32
    %c0_i32_1 = arith.constant 0 : i32
    return %arg0, %c0_i32, %c0_i32_0 : i32, i32, i32
  }
}

module attributes {stable_mosaic.version = 11 : i64} {
  func.func @_conv_bn_relu_kernel(%arg0: i32, %arg1: memref<256x36xbf16, #tpu.memory_space<vmem>>, %arg2: memref<36x8xbf16, #tpu.memory_space<vmem>>, %arg3: memref<1x8xf32, #tpu.memory_space<vmem>>, %arg4: memref<1x8xf32, #tpu.memory_space<vmem>>, %arg5: memref<256x8xf32, #tpu.memory_space<vmem>>) attributes {dimension_semantics = [#tpu.dimension_semantics<parallel>], iteration_bounds = array<i64: 2>, scalar_prefetch = 0 : i64, scratch_operands = 0 : i64, tpu.core_type = #tpu.core_type<tc>, window_params = [{transform_indices = @transform_0, window_bounds = array<i64: 256, 36>}, {pipeline_mode = #tpu.pipeline_mode<synchronous>, transform_indices = @transform_1, window_bounds = array<i64: 36, 8>}, {pipeline_mode = #tpu.pipeline_mode<synchronous>, transform_indices = @transform_2, window_bounds = array<i64: 1, 8>}, {pipeline_mode = #tpu.pipeline_mode<synchronous>, transform_indices = @transform_3, window_bounds = array<i64: 1, 8>}, {transform_indices = @transform_4, window_bounds = array<i64: 256, 8>}]} {
    %c0 = arith.constant 0 : index
    %c0_0 = arith.constant 0 : index
    %0 = vector.load %arg1[%c0, %c0_0] : memref<256x36xbf16, #tpu.memory_space<vmem>>, vector<256x36xbf16>
    %c0_1 = arith.constant 0 : index
    %c0_2 = arith.constant 0 : index
    %1 = vector.load %arg2[%c0_1, %c0_2] : memref<36x8xbf16, #tpu.memory_space<vmem>>, vector<36x8xbf16>
    %cst = arith.constant dense<0.000000e+00> : vector<256x8xf32>
    %2 = tpu.matmul %0, %1, %cst {dimension_numbers = #tpu.dot_dimension_numbers<[1], [0], [0], [1], [0, 0, 1, 1], [], []>} : vector<256x36xbf16>, vector<36x8xbf16>, vector<256x8xf32> -> vector<256x8xf32>
    %c0_3 = arith.constant 0 : index
    %c0_4 = arith.constant 0 : index
    %3 = vector.load %arg3[%c0_3, %c0_4] : memref<1x8xf32, #tpu.memory_space<vmem>>, vector<1x8xf32>
    %4 = vector.broadcast %3 : vector<1x8xf32> to vector<256x8xf32>
    %5 = arith.mulf %2, %4 : vector<256x8xf32>
    %c0_5 = arith.constant 0 : index
    %c0_6 = arith.constant 0 : index
    %6 = vector.load %arg4[%c0_5, %c0_6] : memref<1x8xf32, #tpu.memory_space<vmem>>, vector<1x8xf32>
    %7 = vector.broadcast %6 : vector<1x8xf32> to vector<256x8xf32>
    %8 = arith.addf %5, %7 : vector<256x8xf32>
    %cst_7 = arith.constant 0.000000e+00 : f32
    %9 = vector.broadcast %cst_7 : f32 to vector<256x8xf32>
    %10 = arith.maximumf %8, %9 : vector<256x8xf32>
    %c0_8 = arith.constant 0 : index
    %c0_9 = arith.constant 0 : index
    %11 = vector.load %arg5[%c0_8, %c0_9] : memref<256x8xf32, #tpu.memory_space<vmem>>, vector<256x8xf32>
    tpu.vector_store %arg5[%c0_8, %c0_9], %10 {strides = array<i32>} : memref<256x8xf32, #tpu.memory_space<vmem>>, vector<256x8xf32>,
    return
  }
  func.func @transform_0(%arg0: i32) -> (i32, i32) {
    %c0_i32 = arith.constant 0 : i32
    %c0_i32_0 = arith.constant 0 : i32
    return %arg0, %c0_i32 : i32, i32
  }
  func.func @transform_1(%arg0: i32) -> (i32, i32) {
    %c0_i32 = arith.constant 0 : i32
    %c0_i32_0 = arith.constant 0 : i32
    %c0_i32_1 = arith.constant 0 : i32
    return %c0_i32, %c0_i32_0 : i32, i32
  }
  func.func @transform_2(%arg0: i32) -> (i32, i32) {
    %c0_i32 = arith.constant 0 : i32
    %c0_i32_0 = arith.constant 0 : i32
    %c0_i32_1 = arith.constant 0 : i32
    return %c0_i32, %c0_i32_0 : i32, i32
  }
  func.func @transform_3(%arg0: i32) -> (i32, i32) {
    %c0_i32 = arith.constant 0 : i32
    %c0_i32_0 = arith.constant 0 : i32
    %c0_i32_1 = arith.constant 0 : i32
    return %c0_i32, %c0_i32_0 : i32, i32
  }
  func.func @transform_4(%arg0: i32) -> (i32, i32) {
    %c0_i32 = arith.constant 0 : i32
    %c0_i32_0 = arith.constant 0 : i32
    return %arg0, %c0_i32 : i32, i32
  }
}

</mosaic_0001>

<llo_original>
// kernel: con_bn_relu_2d.2
$region0: #{con_bn_relu_2d.2}
  #allocation0 [shape = 'u32[]', space=smem, size = 0x4, offset = 0x4, fixed_abs, tag = 'smem constant byte address 0x4 - core index']
  #allocation1 [shape = 'u32[144,128]{1,0:T(1,128)}', space=vmem, size = 0x12000, scoped, tag = 'internal scratch']
  %s0 = inlined_call_operand.vmem [shape: bf16[512,36], index: 0, kind: input, shape index: {}]
  %s1 = inlined_call_operand.vmem [shape: bf16[36,8], index: 1, kind: input, shape index: {}]
  %s2 = inlined_call_operand.vmem [shape: f32[2,1,8], index: 2, kind: output, shape index: {0}]
  %s3 = inlined_call_operand.vmem [shape: f32[2,1,8], index: 3, kind: output, shape index: {1}]
  %4 = xla_tuple %s2, %s3
  %s5 = sld [smem:[#allocation0]]
  $region49: #{con_bn_relu_2d.2} parent=0
    _
  %s7 = ssub.s32 1, %s5
  %s8 = scalar_select 0, %s7, %s5
  loop: start=0, step=1, limit=4
  $region2: #{con_bn_relu_2d.2} parent=0 // loop_pre_header
    _
  $region3: #{con_bn_relu_2d.2} parent=0 // loop_header
    %s10 = sphi 0, %s14
    %p11 = scmp.ge.s32.totalorder %s10, 4
    %s20 = sphi 0, %s22
    %s23 = sphi 0, %s20
    %s24 = sphi 0, %s23
    %s40 = sphi 0, %s24
    %s44 = sphi 0, %s44
    %s46 = sphi 0, %s44
    %s47 = sphi 0, %s46
    %s61 = sphi 0, %s47
    %s67 = sphi 0, %s69
    %s70 = sphi 0, %s67
    %s71 = sphi 0, %s70
    %s87 = sphi 0, %s71
    %s93 = sphi 0, %s95
    %s96 = sphi 0, %s93
    %s97 = sphi 0, %s96
    %s113 = sphi 0, %s97
  $region4: #{con_bn_relu_2d.2} parent=0 // loop_header_branch
    %13 = sbr.rel (%p11) target = $region8
  $region5: #{con_bn_relu_2d.2} parent=0 // loop_body
    %s15 = ssub.s32 %s10, 1
    %s16 = ssub.s32 %s10, 2
    %s17 = sadd.s32 %s10, 1
    %s18 = ssub.s32 %s10, %s17
    %p19 = scmp.eq.s32.totalorder %s18, 0
    %s21 = sadd.s32 %s20, 1
    %s22 = scalar_select %p19, %s20, %s21
    %p25 = pneg %p19
    %p26 = scmp.eq.s32.totalorder %s10, 1
    %p27 = por %p25, %p26
    %p28 = scmp.ne.s32.totalorder %s20, %s23
    %p29 = scmp.eq.s32.totalorder %s10, 0
    %p30 = por %p28, %p29
    %p31 = scmp.ne.s32.totalorder %s20, %s23
    %p32 = scmp.eq.s32.totalorder %s15, 1
    %p33 = por %p31, %p32
    %p34 = scmp.ne.s32.totalorder %s23, %s24
    %p35 = scmp.eq.s32.totalorder %s15, 0
    %p36 = por %p34, %p35
    %p37 = scmp.ne.s32.totalorder %s23, %s24
    %p38 = scmp.eq.s32.totalorder %s16, 1
    %p39 = por %p37, %p38
    %p41 = scmp.ne.s32.totalorder %s24, %s40
    %p42 = scmp.eq.s32.totalorder %s16, 0
    %p43 = por %p41, %p42
    %s45 = sadd.s32 %s44, 1
    %p48 = scmp.eq.s32.totalorder %s10, 1
    %p49 = scmp.ne.s32.totalorder %s44, %s46
    %p50 = scmp.eq.s32.totalorder %s10, 0
    %p51 = por %p49, %p50
    %p52 = scmp.ne.s32.totalorder %s44, %s46
    %p53 = scmp.eq.s32.totalorder %s15, 1
    %p54 = por %p52, %p53
    %p55 = scmp.ne.s32.totalorder %s46, %s47
    %p56 = scmp.eq.s32.totalorder %s15, 0
    %p57 = por %p55, %p56
    %p58 = scmp.ne.s32.totalorder %s46, %s47
    %p59 = scmp.eq.s32.totalorder %s16, 1
    %p60 = por %p58, %p59
    %p62 = scmp.ne.s32.totalorder %s47, %s61
    %p63 = scmp.eq.s32.totalorder %s16, 0
    %p64 = por %p62, %p63
    %s65 = ssub.s32 %s10, %s17
    %p66 = scmp.eq.s32.totalorder %s65, 0
    %s68 = sadd.s32 %s67, 1
    %s69 = scalar_select %p66, %s67, %s68
    %p72 = pneg %p66
    %p73 = scmp.eq.s32.totalorder %s10, 1
    %p74 = por %p72, %p73
    %p75 = scmp.ne.s32.totalorder %s67, %s70
    %p76 = scmp.eq.s32.totalorder %s10, 0
    %p77 = por %p75, %p76
    %p78 = scmp.ne.s32.totalorder %s67, %s70
    %p79 = scmp.eq.s32.totalorder %s15, 1
    %p80 = por %p78, %p79
    %p81 = scmp.ne.s32.totalorder %s70, %s71
    %p82 = scmp.eq.s32.totalorder %s15, 0
    %p83 = por %p81, %p82
    %p84 = scmp.ne.s32.totalorder %s70, %s71
    %p85 = scmp.eq.s32.totalorder %s16, 1
    %p86 = por %p84, %p85
    %p88 = scmp.ne.s32.totalorder %s71, %s87
    %p89 = scmp.eq.s32.totalorder %s16, 0
    %p90 = por %p88, %p89
    %s91 = ssub.s32 %s10, %s17
    %p92 = scmp.eq.s32.totalorder %s91, 0
    %s94 = sadd.s32 %s93, 1
    %s95 = scalar_select %p92, %s93, %s94
    %p98 = pneg %p92
    %p99 = scmp.eq.s32.totalorder %s10, 1
    %p100 = por %p98, %p99
    %p101 = scmp.ne.s32.totalorder %s93, %s96
    %p102 = scmp.eq.s32.totalorder %s10, 0
    %p103 = por %p101, %p102
    %p104 = scmp.ne.s32.totalorder %s93, %s96
    %p105 = scmp.eq.s32.totalorder %s15, 1
    %p106 = por %p104, %p105
    %p107 = scmp.ne.s32.totalorder %s96, %s97
    %p108 = scmp.eq.s32.totalorder %s15, 0
    %p109 = por %p107, %p108
    %p110 = scmp.ne.s32.totalorder %s96, %s97
    %p111 = scmp.eq.s32.totalorder %s16, 1
    %p112 = por %p110, %p111
    %p114 = scmp.ne.s32.totalorder %s97, %s113
    %p115 = scmp.eq.s32.totalorder %s16, 0
    %p116 = por %p114, %p115
    %p117 = scmp.le.s32.totalorder 1, %s10
    %p118 = scmp.lt.s32.totalorder %s10, 3
    %p119 = pnand %p117, %p118
    %p120 = pneg %p119
    // Predicated region
    $region9: #{con_bn_relu_2d.2} parent=5 // pred_check
      _
    $region10: #{con_bn_relu_2d.2} parent=5 // pred_check_branch
      %122 = sbr.rel (%p119) target = $region12
    $region11: #{con_bn_relu_2d.2} parent=5 // pred_region
      %s123 = ssub.s32 %s10, 1
      // Predicated region
      $region13: #{con_bn_relu_2d.2} parent=11 // pred_check
        %p124 = pneg %p57
      $region14: #{con_bn_relu_2d.2} parent=11 // pred_check_branch
        %126 = sbr.rel (%p124) target = $region16
      $region15: #{con_bn_relu_2d.2} parent=11 // pred_region
        _
      $region16: #{con_bn_relu_2d.2} parent=11 // pred_fallthru
        _
    $region12: #{con_bn_relu_2d.2} parent=5 // pred_fallthru
      _
    %p127 = scmp.lt.s32.totalorder %s10, 2
    // Predicated region
    $region17: #{con_bn_relu_2d.2} parent=5 // pred_check
      %p128 = pneg %p127
    $region18: #{con_bn_relu_2d.2} parent=5 // pred_check_branch
      %130 = sbr.rel (%p128) target = $region20
    $region19: #{con_bn_relu_2d.2} parent=5 // pred_region
      // Predicated region
      $region21: #{con_bn_relu_2d.2} parent=19 // pred_check
        %p131 = pneg %p30
      $region22: #{con_bn_relu_2d.2} parent=19 // pred_check_branch
        %133 = sbr.rel (%p131) target = $region24
      $region23: #{con_bn_relu_2d.2} parent=19 // pred_region
        %s134 = smul.u32 32, %s10
        %p135 = scmp.lt.s32.totalorder %s134, 63
        %s136 = scalar_select %p135, %s134, 63
        %s137 = smul.addr %s136, 4
        %s138 = scalar_lea.vmem %s0, %s137
        %s139 = smul.u32 32, %s10
      $region24: #{con_bn_relu_2d.2} parent=19 // pred_fallthru
        _
    $region20: #{con_bn_relu_2d.2} parent=5 // pred_fallthru
      _
    %p140 = scmp.le.s32.totalorder 1, %s10
    %p141 = scmp.lt.s32.totalorder %s10, 3
    %p142 = pnand %p140, %p141
    %p143 = pneg %p142
    // Predicated region
    $region25: #{con_bn_relu_2d.2} parent=5 // pred_check
      _
    $region26: #{con_bn_relu_2d.2} parent=5 // pred_check_branch
      %145 = sbr.rel (%p142) target = $region28
    $region27: #{con_bn_relu_2d.2} parent=5 // pred_region
      %s146 = ssub.s32 %s10, 1
      %s147 = smul.u32 32, %s15
      %p148 = scmp.lt.s32.totalorder %s147, 63
      %s149 = scalar_select %p148, %s147, 63
      %s150 = smul.addr %s149, 4
      %s151 = scalar_lea.vmem %s0, %s150
      %p152 = pneg %p36
      %p153 = pneg %p33
      %p154 = pneg %p57
      %p155 = pneg %p54
      %p156 = pneg %p83
      %p157 = pneg %p80
      %p158 = scmp.lt.s32.totalorder %s15, 1
      %s159 = scalar_select %p158, %s15, 1
      %s160 = scalar_lea.vmem %s2, %s159
      %p161 = pneg %p109
      %p162 = pneg %p106
      %p163 = scmp.lt.s32.totalorder %s15, 1
      %s164 = scalar_select %p163, %s15, 1
      %s165 = scalar_lea.vmem %s3, %s164
      %s166 = smul.u32 32, %s15
      %p167 = scmp.lt.s32.totalorder %s166, 63
      %s168 = scalar_select %p167, %s166, 63
      %s169 = smul.addr %s168, 4
      %s170 = scalar_lea.vmem %s0, %s169
      %s171 = smul.u32 32, %s15
      %p172 = scmp.lt.s32.totalorder %s15, 1
      %s173 = scalar_select %p172, %s15, 1
      %s174 = scalar_lea.vmem %s2, %s173
      %p175 = scmp.lt.s32.totalorder %s15, 1
      %s176 = scalar_select %p175, %s15, 1
      %s177 = scalar_lea.vmem %s3, %s176
      %v180 = vld [vmem:[%s170] sm:$0xf]
      %v181 = vld [vmem:[%s170 + $0x4] sm:$0xf]
      %v182 = vld [vmem:[%s170 + $0x8] sm:$0xf]
      %v183 = vld [vmem:[%s170 + $0xc] sm:$0xf]
      %v184 = vld [vmem:[%s170 + $0x10] sm:$0xf]
      %v185 = vld [vmem:[%s170 + $0x14] sm:$0xf]
      %v186 = vld [vmem:[%s170 + $0x18] sm:$0xf]
      %v187 = vld [vmem:[%s170 + $0x1c] sm:$0xf]
      %v188 = vld [vmem:[%s170 + $0x20] sm:$0xf]
      %v189 = vld [vmem:[%s170 + $0x24] sm:$0xf]
      %v190 = vld [vmem:[%s170 + $0x28] sm:$0xf]
      %v191 = vld [vmem:[%s170 + $0x2c] sm:$0xf]
      %v192 = vld [vmem:[%s170 + $0x30] sm:$0xf]
      %v193 = vld [vmem:[%s170 + $0x34] sm:$0xf]
      %v194 = vld [vmem:[%s170 + $0x38] sm:$0xf]
      %v195 = vld [vmem:[%s170 + $0x3c] sm:$0xf]
      %v196 = vld [vmem:[%s170 + $0x40] sm:$0xf]
      %v197 = vld [vmem:[%s170 + $0x44] sm:$0xf]
      %v198 = vld [vmem:[%s170 + $0x48] sm:$0xf]
      %v199 = vld [vmem:[%s170 + $0x4c] sm:$0xf]
      %v200 = vld [vmem:[%s170 + $0x50] sm:$0xf]
      %v201 = vld [vmem:[%s170 + $0x54] sm:$0xf]
      %v202 = vld [vmem:[%s170 + $0x58] sm:$0xf]
      %v203 = vld [vmem:[%s170 + $0x5c] sm:$0xf]
      %v204 = vld [vmem:[%s170 + $0x60] sm:$0xf]
      %v205 = vld [vmem:[%s170 + $0x64] sm:$0xf]
      %v206 = vld [vmem:[%s170 + $0x68] sm:$0xf]
      %v207 = vld [vmem:[%s170 + $0x6c] sm:$0xf]
      %v208 = vld [vmem:[%s170 + $0x70] sm:$0xf]
      %v209 = vld [vmem:[%s170 + $0x74] sm:$0xf]
      %v210 = vld [vmem:[%s170 + $0x78] sm:$0xf]
      %v211 = vld [vmem:[%s170 + $0x7c] sm:$0xf]
      %v212 = vld [vmem:[%s1] sm:$0xf]
      %v213 = vld [vmem:[%s1 + $0x4] sm:$0xf]
      %v214 = vld [vmem:[%s1 + $0x8] sm:$0xf]
      %v215 = vld [vmem:[%s1 + $0xc] sm:$0xf]
      %v216 = vld [vmem:[%s1 + $0x10] sm:$0x3]
      %v249 = vunpack.c.l.b16 %v180
      %v250 = vunpack.c.l.b16 %v181
      %v251 = vunpack.c.l.b16 %v182
      %v252 = vunpack.c.l.b16 %v183
      %v253 = vunpack.c.l.b16 %v184
      %v254 = vunpack.c.l.b16 %v185
      %v255 = vunpack.c.l.b16 %v186
      %v256 = vunpack.c.l.b16 %v187
      %v257 = vunpack.c.l.b16 %v188
      %v258 = vunpack.c.l.b16 %v189
      %v259 = vunpack.c.l.b16 %v190
      %v260 = vunpack.c.l.b16 %v191
      %v261 = vunpack.c.l.b16 %v192
      %v262 = vunpack.c.l.b16 %v193
      %v263 = vunpack.c.l.b16 %v194
      %v264 = vunpack.c.l.b16 %v195
      %v265 = vunpack.c.l.b16 %v196
      %v266 = vunpack.c.l.b16 %v197
      %v267 = vunpack.c.l.b16 %v198
      %v268 = vunpack.c.l.b16 %v199
      %v269 = vunpack.c.l.b16 %v200
      %v270 = vunpack.c.l.b16 %v201
      %v271 = vunpack.c.l.b16 %v202
      %v272 = vunpack.c.l.b16 %v203
      %v273 = vunpack.c.l.b16 %v204
      %v274 = vunpack.c.l.b16 %v205
      %v275 = vunpack.c.l.b16 %v206
      %v276 = vunpack.c.l.b16 %v207
      %v277 = vunpack.c.l.b16 %v208
      %v278 = vunpack.c.l.b16 %v209
      %v279 = vunpack.c.l.b16 %v210
      %v280 = vunpack.c.l.b16 %v211
      %v281 = vpack.c.b16 %v250, %v249
      %v282 = vpack.c.b16 %v252, %v251
      %v283 = vpack.c.b16 %v254, %v253
      %v284 = vpack.c.b16 %v256, %v255
      %v285 = vpack.c.b16 %v258, %v257
      %v286 = vpack.c.b16 %v260, %v259
      %v287 = vpack.c.b16 %v262, %v261
      %v288 = vpack.c.b16 %v264, %v263
      %v289 = vpack.c.b16 %v266, %v265
      %v290 = vpack.c.b16 %v268, %v267
      %v291 = vpack.c.b16 %v270, %v269
      %v292 = vpack.c.b16 %v272, %v271
      %v293 = vpack.c.b16 %v274, %v273
      %v294 = vpack.c.b16 %v276, %v275
      %v295 = vpack.c.b16 %v278, %v277
      %v296 = vpack.c.b16 %v280, %v279
      %v302 = vunpack.c.l.b16 %v212
      %v303 = vunpack.c.l.b16 %v213
      %v304 = vunpack.c.l.b16 %v214
      %v305 = vunpack.c.l.b16 %v215
      %v306 = vunpack.c.l.b16 %v216
      %v307 = vpack.c.b16 %v303, %v302
      %v308 = vpack.c.b16 %v305, %v304
      %v309 = vpack.c.b16 %v306, %v306
      %vm312 = vcmask 293888
      %v314 = vsel %vm312, %v281, 0
      %v317 = vsel %vm312, %v282, 0
      %v320 = vsel %vm312, %v283, 0
      %v323 = vsel %vm312, %v284, 0
      %v326 = vsel %vm312, %v285, 0
      %v329 = vsel %vm312, %v286, 0
      %v332 = vsel %vm312, %v287, 0
      %v335 = vsel %vm312, %v288, 0
      %v338 = vsel %vm312, %v289, 0
      %v341 = vsel %vm312, %v290, 0
      %v344 = vsel %vm312, %v291, 0
      %v347 = vsel %vm312, %v292, 0
      %v350 = vsel %vm312, %v293, 0
      %v353 = vsel %vm312, %v294, 0
      %v356 = vsel %vm312, %v295, 0
      %v359 = vsel %vm312, %v296, 0
      %vm361 = vcmask 1041408
      %v363 = vsel %vm361, %v309, 0
      %365 = vmatprep.subr.bf16.mxu0 0
      %366 = vmatpush1.bf16.msra.mxu0 %v307
      %367 = vmatprep.subr.bf16.mxu0 0
      %368 = vmatpush1.bf16.msra.mxu0 %v308
      %369 = vmatprep.subr.bf16.mxu0 0
      %370 = vmatpush1.bf16.msra.mxu0 %v363
      %371 = vmatprep.subr.bf16.mxu0 0
      %372 = vmatpush1.bf16.msra.mxu0 0
      %373 = vmatprep.subr.bf16.mxu0 0
      %374 = vmatpush1.bf16.msra.mxu0 0
      %375 = vmatprep.subr.bf16.mxu0 0
      %376 = vmatpush1.bf16.msra.mxu0 0
      %377 = vmatprep.subr.bf16.mxu0 0
      %378 = vmatpush1.bf16.msra.mxu0 0
      %379 = vmatprep.subr.bf16.mxu0 0
      %380 = vmatpush1.bf16.msra.mxu0 0
      %381 = vmatprep.subr.bf16.mxu0 0
      %382 = vmatpush1.bf16.msra.mxu0 0
      %383 = vmatprep.subr.bf16.mxu0 0
      %384 = vmatpush1.bf16.msra.mxu0 0
      %385 = vmatprep.subr.bf16.mxu0 0
      %386 = vmatpush1.bf16.msra.mxu0 0
      %387 = vmatprep.subr.bf16.mxu0 0
      %388 = vmatpush1.bf16.msra.mxu0 0
      %389 = vmatprep.subr.bf16.mxu0 0
      %390 = vmatpush1.bf16.msra.mxu0 0
      %391 = vmatprep.subr.bf16.mxu0 0
      %392 = vmatpush1.bf16.msra.mxu0 0
      %393 = vmatprep.subr.bf16.mxu0 0
      %394 = vmatpush1.bf16.msra.mxu0 0
      %395 = vmatprep.subr.bf16.mxu0 0
      %396 = vmatpush1.bf16.msra.mxu0 0
      %397 = vmatprep.mubr.bf16.mxu0 0
      %398 = vmatmul.mubr.bf16.gmra.mrb[0].mxu0 %v314
      %v399 = vpop.f32.mrb[0].mxu0
      %v400 = vadd.f32 0.0, %v399
      %v401 = vpop.f32.mrb[0].mxu0
      %v402 = vpop.f32.mrb[0].mxu0
      %v403 = vadd.f32 0.0, %v402
      %v404 = vpop.f32.mrb[0].mxu0
      %405 = vmatprep.mubr.bf16.mxu0 0
      %406 = vmatmul.mubr.bf16.gmra.mrb[0].mxu0 %v317
      %v407 = vpop.f32.mrb[0].mxu0
      %v408 = vadd.f32 0.0, %v407
      %v409 = vpop.f32.mrb[0].mxu0
      %v410 = vpop.f32.mrb[0].mxu0
      %v411 = vadd.f32 0.0, %v410
      %v412 = vpop.f32.mrb[0].mxu0
      %413 = vmatprep.mubr.bf16.mxu0 0
      %414 = vmatmul.mubr.bf16.gmra.mrb[0].mxu0 %v320
      %v415 = vpop.f32.mrb[0].mxu0
      %v416 = vadd.f32 0.0, %v415
      %v417 = vpop.f32.mrb[0].mxu0
      %v418 = vpop.f32.mrb[0].mxu0
      %v419 = vadd.f32 0.0, %v418
      %v420 = vpop.f32.mrb[0].mxu0
      %421 = vmatprep.mubr.bf16.mxu0 0
      %422 = vmatmul.mubr.bf16.gmra.mrb[0].mxu0 %v323
      %v423 = vpop.f32.mrb[0].mxu0
      %v424 = vadd.f32 0.0, %v423
      %v425 = vpop.f32.mrb[0].mxu0
      %v426 = vpop.f32.mrb[0].mxu0
      %v427 = vadd.f32 0.0, %v426
      %v428 = vpop.f32.mrb[0].mxu0
      %429 = vmatprep.mubr.bf16.mxu0 0
      %430 = vmatmul.mubr.bf16.gmra.mrb[0].mxu0 %v326
      %v431 = vpop.f32.mrb[0].mxu0
      %v432 = vadd.f32 0.0, %v431
      %v433 = vpop.f32.mrb[0].mxu0
      %v434 = vpop.f32.mrb[0].mxu0
      %v435 = vadd.f32 0.0, %v434
      %v436 = vpop.f32.mrb[0].mxu0
      %437 = vmatprep.mubr.bf16.mxu0 0
      %438 = vmatmul.mubr.bf16.gmra.mrb[0].mxu0 %v329
      %v439 = vpop.f32.mrb[0].mxu0
      %v440 = vadd.f32 0.0, %v439
      %v441 = vpop.f32.mrb[0].mxu0
      %v442 = vpop.f32.mrb[0].mxu0
      %v443 = vadd.f32 0.0, %v442
      %v444 = vpop.f32.mrb[0].mxu0
      %445 = vmatprep.mubr.bf16.mxu0 0
      %446 = vmatmul.mubr.bf16.gmra.mrb[0].mxu0 %v332
      %v447 = vpop.f32.mrb[0].mxu0
      %v448 = vadd.f32 0.0, %v447
      %v449 = vpop.f32.mrb[0].mxu0
      %v450 = vpop.f32.mrb[0].mxu0
      %v451 = vadd.f32 0.0, %v450
      %v452 = vpop.f32.mrb[0].mxu0
      %453 = vmatprep.mubr.bf16.mxu0 0
      %454 = vmatmul.mubr.bf16.gmra.mrb[0].mxu0 %v335
      %v455 = vpop.f32.mrb[0].mxu0
      %v456 = vadd.f32 0.0, %v455
      %v457 = vpop.f32.mrb[0].mxu0
      %v458 = vpop.f32.mrb[0].mxu0
      %v459 = vadd.f32 0.0, %v458
      %v460 = vpop.f32.mrb[0].mxu0
      %461 = vmatprep.mubr.bf16.mxu0 0
      %462 = vmatmul.mubr.bf16.gmra.mrb[0].mxu0 %v338
      %v463 = vpop.f32.mrb[0].mxu0
      %v464 = vadd.f32 0.0, %v463
      %v465 = vpop.f32.mrb[0].mxu0
      %v466 = vpop.f32.mrb[0].mxu0
      %v467 = vadd.f32 0.0, %v466
      %v468 = vpop.f32.mrb[0].mxu0
      %469 = vmatprep.mubr.bf16.mxu0 0
      %470 = vmatmul.mubr.bf16.gmra.mrb[0].mxu0 %v341
      %v471 = vpop.f32.mrb[0].mxu0
      %v472 = vadd.f32 0.0, %v471
      %v473 = vpop.f32.mrb[0].mxu0
      %v474 = vpop.f32.mrb[0].mxu0
      %v475 = vadd.f32 0.0, %v474
      %v476 = vpop.f32.mrb[0].mxu0
      %477 = vmatprep.mubr.bf16.mxu0 0
      %478 = vmatmul.mubr.bf16.gmra.mrb[0].mxu0 %v344
      %v479 = vpop.f32.mrb[0].mxu0
      %v480 = vadd.f32 0.0, %v479
      %v481 = vpop.f32.mrb[0].mxu0
      %v482 = vpop.f32.mrb[0].mxu0
      %v483 = vadd.f32 0.0, %v482
      %v484 = vpop.f32.mrb[0].mxu0
      %485 = vmatprep.mubr.bf16.mxu0 0
      %486 = vmatmul.mubr.bf16.gmra.mrb[0].mxu0 %v347
      %v487 = vpop.f32.mrb[0].mxu0
      %v488 = vadd.f32 0.0, %v487
      %v489 = vpop.f32.mrb[0].mxu0
      %v490 = vpop.f32.mrb[0].mxu0
      %v491 = vadd.f32 0.0, %v490
      %v492 = vpop.f32.mrb[0].mxu0
      %493 = vmatprep.mubr.bf16.mxu0 0
      %494 = vmatmul.mubr.bf16.gmra.mrb[0].mxu0 %v350
      %v495 = vpop.f32.mrb[0].mxu0
      %v496 = vadd.f32 0.0, %v495
      %v497 = vpop.f32.mrb[0].mxu0
      %v498 = vpop.f32.mrb[0].mxu0
      %v499 = vadd.f32 0.0, %v498
      %v500 = vpop.f32.mrb[0].mxu0
      %501 = vmatprep.mubr.bf16.mxu0 0
      %502 = vmatmul.mubr.bf16.gmra.mrb[0].mxu0 %v353
      %v503 = vpop.f32.mrb[0].mxu0
      %v504 = vadd.f32 0.0, %v503
      %v505 = vpop.f32.mrb[0].mxu0
      %v506 = vpop.f32.mrb[0].mxu0
      %v507 = vadd.f32 0.0, %v506
      %v508 = vpop.f32.mrb[0].mxu0
      %509 = vmatprep.mubr.bf16.mxu0 0
      %510 = vmatmul.mubr.bf16.gmra.mrb[0].mxu0 %v356
      %v511 = vpop.f32.mrb[0].mxu0
      %v512 = vadd.f32 0.0, %v511
      %v513 = vpop.f32.mrb[0].mxu0
      %v514 = vpop.f32.mrb[0].mxu0
      %v515 = vadd.f32 0.0, %v514
      %v516 = vpop.f32.mrb[0].mxu0
      %517 = vmatprep.mubr.bf16.mxu0 0
      %518 = vmatmul.mubr.bf16.gmra.mrb[0].mxu0 %v359
      %v519 = vpop.f32.mrb[0].mxu0
      %v520 = vadd.f32 0.0, %v519
      %v521 = vpop.f32.mrb[0].mxu0
      %v522 = vpop.f32.mrb[0].mxu0
      %v523 = vadd.f32 0.0, %v522
      %v524 = vpop.f32.mrb[0].mxu0
      %525 = vdwg.mxu0
      %v526 = vpack.c.bf16 %v403, %v400
      %v527 = vpack.c.bf16 %v411, %v408
      %v528 = vpack.c.bf16 %v419, %v416
      %v529 = vpack.c.bf16 %v427, %v424
      %v530 = vpack.c.bf16 %v435, %v432
      %v531 = vpack.c.bf16 %v443, %v440
      %v532 = vpack.c.bf16 %v451, %v448
      %v533 = vpack.c.bf16 %v459, %v456
      %v534 = vpack.c.bf16 %v467, %v464
      %v535 = vpack.c.bf16 %v475, %v472
      %v536 = vpack.c.bf16 %v483, %v480
      %v537 = vpack.c.bf16 %v491, %v488
      %v538 = vpack.c.bf16 %v499, %v496
      %v539 = vpack.c.bf16 %v507, %v504
      %v540 = vpack.c.bf16 %v515, %v512
      %v541 = vpack.c.bf16 %v523, %v520
      %542 = vmatprep.subr.bf16.mxu0 0
      %543 = vmatpush1.bf16.msra.mxu0 %v526
      %544 = vmatprep.subr.bf16.mxu0 0
      %545 = vmatpush1.bf16.msra.mxu0 %v527
      %546 = vmatprep.subr.bf16.mxu0 0
      %547 = vmatpush1.bf16.msra.mxu0 %v528
      %548 = vmatprep.subr.bf16.mxu0 0
      %549 = vmatpush1.bf16.msra.mxu0 %v529
      %550 = vmatprep.subr.bf16.mxu0 0
      %551 = vmatpush1.bf16.msra.mxu0 %v530
      %552 = vmatprep.subr.bf16.mxu0 0
      %553 = vmatpush1.bf16.msra.mxu0 %v531
      %554 = vmatprep.subr.bf16.mxu0 0
      %555 = vmatpush1.bf16.msra.mxu0 %v532
      %556 = vmatprep.subr.bf16.mxu0 0
      %557 = vmatpush1.bf16.msra.mxu0 %v533
      %558 = vmatprep.subr.bf16.mxu0 0
      %559 = vmatpush1.bf16.msra.mxu0 %v534
      %560 = vmatprep.subr.bf16.mxu0 0
      %561 = vmatpush1.bf16.msra.mxu0 %v535
      %562 = vmatprep.subr.bf16.mxu0 0
      %563 = vmatpush1.bf16.msra.mxu0 %v536
      %564 = vmatprep.subr.bf16.mxu0 0
      %565 = vmatpush1.bf16.msra.mxu0 %v537
      %566 = vmatprep.subr.bf16.mxu0 0
      %567 = vmatpush1.bf16.msra.mxu0 %v538
      %568 = vmatprep.subr.bf16.mxu0 0
      %569 = vmatpush1.bf16.msra.mxu0 %v539
      %570 = vmatprep.subr.bf16.mxu0 0
      %571 = vmatpush1.bf16.msra.mxu0 %v540
      %572 = vmatprep.subr.bf16.mxu0 0
      %573 = vmatpush1.bf16.msra.mxu0 %v541
      %574 = vmatprep.mubr.bf16.mxu0 1065369472
      %575 = vmatmul.mubr.bf16.gmra.mrb[0].mxu0 1065369472
      %v576 = vpop.f32.mrb[0].mxu0
      %v577 = vadd.f32 0.0, %v576
      %v578 = vpop.f32.mrb[0].mxu0
      %v579 = vpop.f32.mrb[0].mxu0
      %v580 = vpop.f32.mrb[0].mxu0
      %581 = vdwg.mxu0
      %vm582 = vcmask 57344
      %583 = vst.msk [vmem:[%s174] sm:$0x1] %vm582, %v577
      %v584 = vmul.bf16 %v526, %v526
      %v585 = vmul.bf16 %v527, %v527
      %v586 = vmul.bf16 %v528, %v528
      %v587 = vmul.bf16 %v529, %v529
      %v588 = vmul.bf16 %v530, %v530
      %v589 = vmul.bf16 %v531, %v531
      %v590 = vmul.bf16 %v532, %v532
      %v591 = vmul.bf16 %v533, %v533
      %v592 = vmul.bf16 %v534, %v534
      %v593 = vmul.bf16 %v535, %v535
      %v594 = vmul.bf16 %v536, %v536
      %v595 = vmul.bf16 %v537, %v537
      %v596 = vmul.bf16 %v538, %v538
      %v597 = vmul.bf16 %v539, %v539
      %v598 = vmul.bf16 %v540, %v540
      %v599 = vmul.bf16 %v541, %v541
      %600 = vmatprep.subr.bf16.mxu0 0
      %601 = vmatpush1.bf16.msra.mxu0 %v584
      %602 = vmatprep.subr.bf16.mxu0 0
      %603 = vmatpush1.bf16.msra.mxu0 %v585
      %604 = vmatprep.subr.bf16.mxu0 0
      %605 = vmatpush1.bf16.msra.mxu0 %v586
      %606 = vmatprep.subr.bf16.mxu0 0
      %607 = vmatpush1.bf16.msra.mxu0 %v587
      %608 = vmatprep.subr.bf16.mxu0 0
      %609 = vmatpush1.bf16.msra.mxu0 %v588
      %610 = vmatprep.subr.bf16.mxu0 0
      %611 = vmatpush1.bf16.msra.mxu0 %v589
      %612 = vmatprep.subr.bf16.mxu0 0
      %613 = vmatpush1.bf16.msra.mxu0 %v590
      %614 = vmatprep.subr.bf16.mxu0 0
      %615 = vmatpush1.bf16.msra.mxu0 %v591
      %616 = vmatprep.subr.bf16.mxu0 0
      %617 = vmatpush1.bf16.msra.mxu0 %v592
      %618 = vmatprep.subr.bf16.mxu0 0
      %619 = vmatpush1.bf16.msra.mxu0 %v593
      %620 = vmatprep.subr.bf16.mxu0 0
      %621 = vmatpush1.bf16.msra.mxu0 %v594
      %622 = vmatprep.subr.bf16.mxu0 0
      %623 = vmatpush1.bf16.msra.mxu0 %v595
      %624 = vmatprep.subr.bf16.mxu0 0
      %625 = vmatpush1.bf16.msra.mxu0 %v596
      %626 = vmatprep.subr.bf16.mxu0 0
      %627 = vmatpush1.bf16.msra.mxu0 %v597
      %628 = vmatprep.subr.bf16.mxu0 0
      %629 = vmatpush1.bf16.msra.mxu0 %v598
      %630 = vmatprep.subr.bf16.mxu0 0
      %631 = vmatpush1.bf16.msra.mxu0 %v599
      %632 = vmatprep.mubr.bf16.mxu0 1065369472
      %633 = vmatmul.mubr.bf16.gmra.mrb[0].mxu0 1065369472
      %v634 = vpop.f32.mrb[0].mxu0
      %v635 = vadd.f32 0.0, %v634
      %v636 = vpop.f32.mrb[0].mxu0
      %v637 = vpop.f32.mrb[0].mxu0
      %v638 = vpop.f32.mrb[0].mxu0
      %639 = vdwg.mxu0
      %640 = vst.msk [vmem:[%s177] sm:$0x1] %vm582, %v635
      %p641 = scmp.lt.s32.totalorder %s15, 1
      %s642 = scalar_select %p641, %s15, 1
      %s643 = scalar_lea.vmem %s2, %s642
      %p644 = scmp.lt.s32.totalorder %s15, 1
      %s645 = scalar_select %p644, %s15, 1
      %s646 = scalar_lea.vmem %s3, %s645
      // Predicated region
      $region29: #{con_bn_relu_2d.2} parent=27 // pred_check
        %p647 = pneg %p80
      $region30: #{con_bn_relu_2d.2} parent=27 // pred_check_branch
        %649 = sbr.rel (%p647) target = $region32
      $region31: #{con_bn_relu_2d.2} parent=27 // pred_region
        _
      $region32: #{con_bn_relu_2d.2} parent=27 // pred_fallthru
        _
      // Predicated region
      $region33: #{con_bn_relu_2d.2} parent=27 // pred_check
        %p650 = pneg %p106
      $region34: #{con_bn_relu_2d.2} parent=27 // pred_check_branch
        %652 = sbr.rel (%p650) target = $region36
      $region35: #{con_bn_relu_2d.2} parent=27 // pred_region
        _
      $region36: #{con_bn_relu_2d.2} parent=27 // pred_fallthru
        _
    $region28: #{con_bn_relu_2d.2} parent=5 // pred_fallthru
      _
    %p653 = scmp.le.s32.totalorder 2, %s10
    // Predicated region
    $region37: #{con_bn_relu_2d.2} parent=5 // pred_check
      %p654 = pneg %p653
    $region38: #{con_bn_relu_2d.2} parent=5 // pred_check_branch
      %656 = sbr.rel (%p654) target = $region40
    $region39: #{con_bn_relu_2d.2} parent=5 // pred_region
      %s657 = ssub.s32 %s10, 2
      // Predicated region
      $region41: #{con_bn_relu_2d.2} parent=39 // pred_check
        %p658 = pneg %p86
      $region42: #{con_bn_relu_2d.2} parent=39 // pred_check_branch
        %660 = sbr.rel (%p658) target = $region44
      $region43: #{con_bn_relu_2d.2} parent=39 // pred_region
        %p661 = scmp.lt.s32.totalorder %s16, 1
        %s662 = scalar_select %p661, %s16, 1
        %s663 = scalar_lea.vmem %s2, %s662
      $region44: #{con_bn_relu_2d.2} parent=39 // pred_fallthru
        _
      // Predicated region
      $region45: #{con_bn_relu_2d.2} parent=39 // pred_check
        %p664 = pneg %p112
      $region46: #{con_bn_relu_2d.2} parent=39 // pred_check_branch
        %666 = sbr.rel (%p664) target = $region48
      $region47: #{con_bn_relu_2d.2} parent=39 // pred_region
        %p667 = scmp.lt.s32.totalorder %s16, 1
        %s668 = scalar_select %p667, %s16, 1
        %s669 = scalar_lea.vmem %s3, %s668
      $region48: #{con_bn_relu_2d.2} parent=39 // pred_fallthru
        _
    $region40: #{con_bn_relu_2d.2} parent=5 // pred_fallthru
      _
  $region6: #{con_bn_relu_2d.2} parent=0 // loop_footer
    %s14 = sadd.s32 1, %s10
  $region7: #{con_bn_relu_2d.2} parent=0 // loop_footer_branch
    %9 = sbr.rel target = $region3
  $region8: #{con_bn_relu_2d.2} parent=0 // loop_exit
    _

// kernel: con_bn_relu_2d.3
$region0: #{con_bn_relu_2d.3}
  #allocation0 [shape = 'u32[]', space=smem, size = 0x4, offset = 0x4, fixed_abs, tag = 'smem constant byte address 0x4 - core index']
  #allocation1 [shape = 'u32[144,128]{1,0:T(1,128)}', space=vmem, size = 0x12000, scoped, tag = 'internal scratch']
  %s0 = inlined_call_operand.vmem [shape: bf16[512,36], index: 0, kind: input, shape index: {}]
  %s1 = inlined_call_operand.vmem [shape: bf16[36,8], index: 1, kind: input, shape index: {}]
  %s2 = inlined_call_operand.vmem [shape: f32[1,8], index: 2, kind: input, shape index: {}]
  %s3 = inlined_call_operand.vmem [shape: f32[1,8], index: 3, kind: input, shape index: {}]
  %s4 = inlined_call_operand.vmem [shape: f32[512,8], index: 4, kind: output, shape index: {}]
  %s5 = sld [smem:[#allocation0]]
  $region49: #{con_bn_relu_2d.3} parent=0
    _
  %s7 = ssub.s32 1, %s5
  %s8 = scalar_select 0, %s7, %s5
  loop: start=0, step=1, limit=4
  $region2: #{con_bn_relu_2d.3} parent=0 // loop_pre_header
    _
  $region3: #{con_bn_relu_2d.3} parent=0 // loop_header
    %s10 = sphi 0, %s14
    %p11 = scmp.ge.s32.totalorder %s10, 4
    %s20 = sphi 0, %s22
    %s23 = sphi 0, %s20
    %s24 = sphi 0, %s23
    %s40 = sphi 0, %s24
    %s44 = sphi 0, %s44
    %s46 = sphi 0, %s44
    %s47 = sphi 0, %s46
    %s61 = sphi 0, %s47
    %s65 = sphi 0, %s65
    %s67 = sphi 0, %s65
    %s68 = sphi 0, %s67
    %s82 = sphi 0, %s68
    %s86 = sphi 0, %s86
    %s88 = sphi 0, %s86
    %s89 = sphi 0, %s88
    %s103 = sphi 0, %s89
    %s109 = sphi 0, %s111
    %s112 = sphi 0, %s109
    %s113 = sphi 0, %s112
    %s129 = sphi 0, %s113
  $region4: #{con_bn_relu_2d.3} parent=0 // loop_header_branch
    %13 = sbr.rel (%p11) target = $region8
  $region5: #{con_bn_relu_2d.3} parent=0 // loop_body
    %s15 = ssub.s32 %s10, 1
    %s16 = ssub.s32 %s10, 2
    %s17 = sadd.s32 %s10, 1
    %s18 = ssub.s32 %s10, %s17
    %p19 = scmp.eq.s32.totalorder %s18, 0
    %s21 = sadd.s32 %s20, 1
    %s22 = scalar_select %p19, %s20, %s21
    %p25 = pneg %p19
    %p26 = scmp.eq.s32.totalorder %s10, 1
    %p27 = por %p25, %p26
    %p28 = scmp.ne.s32.totalorder %s20, %s23
    %p29 = scmp.eq.s32.totalorder %s10, 0
    %p30 = por %p28, %p29
    %p31 = scmp.ne.s32.totalorder %s20, %s23
    %p32 = scmp.eq.s32.totalorder %s15, 1
    %p33 = por %p31, %p32
    %p34 = scmp.ne.s32.totalorder %s23, %s24
    %p35 = scmp.eq.s32.totalorder %s15, 0
    %p36 = por %p34, %p35
    %p37 = scmp.ne.s32.totalorder %s23, %s24
    %p38 = scmp.eq.s32.totalorder %s16, 1
    %p39 = por %p37, %p38
    %p41 = scmp.ne.s32.totalorder %s24, %s40
    %p42 = scmp.eq.s32.totalorder %s16, 0
    %p43 = por %p41, %p42
    %s45 = sadd.s32 %s44, 1
    %p48 = scmp.eq.s32.totalorder %s10, 1
    %p49 = scmp.ne.s32.totalorder %s44, %s46
    %p50 = scmp.eq.s32.totalorder %s10, 0
    %p51 = por %p49, %p50
    %p52 = scmp.ne.s32.totalorder %s44, %s46
    %p53 = scmp.eq.s32.totalorder %s15, 1
    %p54 = por %p52, %p53
    %p55 = scmp.ne.s32.totalorder %s46, %s47
    %p56 = scmp.eq.s32.totalorder %s15, 0
    %p57 = por %p55, %p56
    %p58 = scmp.ne.s32.totalorder %s46, %s47
    %p59 = scmp.eq.s32.totalorder %s16, 1
    %p60 = por %p58, %p59
    %p62 = scmp.ne.s32.totalorder %s47, %s61
    %p63 = scmp.eq.s32.totalorder %s16, 0
    %p64 = por %p62, %p63
    %s66 = sadd.s32 %s65, 1
    %p69 = scmp.eq.s32.totalorder %s10, 1
    %p70 = scmp.ne.s32.totalorder %s65, %s67
    %p71 = scmp.eq.s32.totalorder %s10, 0
    %p72 = por %p70, %p71
    %p73 = scmp.ne.s32.totalorder %s65, %s67
    %p74 = scmp.eq.s32.totalorder %s15, 1
    %p75 = por %p73, %p74
    %p76 = scmp.ne.s32.totalorder %s67, %s68
    %p77 = scmp.eq.s32.totalorder %s15, 0
    %p78 = por %p76, %p77
    %p79 = scmp.ne.s32.totalorder %s67, %s68
    %p80 = scmp.eq.s32.totalorder %s16, 1
    %p81 = por %p79, %p80
    %p83 = scmp.ne.s32.totalorder %s68, %s82
    %p84 = scmp.eq.s32.totalorder %s16, 0
    %p85 = por %p83, %p84
    %s87 = sadd.s32 %s86, 1
    %p90 = scmp.eq.s32.totalorder %s10, 1
    %p91 = scmp.ne.s32.totalorder %s86, %s88
    %p92 = scmp.eq.s32.totalorder %s10, 0
    %p93 = por %p91, %p92
    %p94 = scmp.ne.s32.totalorder %s86, %s88
    %p95 = scmp.eq.s32.totalorder %s15, 1
    %p96 = por %p94, %p95
    %p97 = scmp.ne.s32.totalorder %s88, %s89
    %p98 = scmp.eq.s32.totalorder %s15, 0
    %p99 = por %p97, %p98
    %p100 = scmp.ne.s32.totalorder %s88, %s89
    %p101 = scmp.eq.s32.totalorder %s16, 1
    %p102 = por %p100, %p101
    %p104 = scmp.ne.s32.totalorder %s89, %s103
    %p105 = scmp.eq.s32.totalorder %s16, 0
    %p106 = por %p104, %p105
    %s107 = ssub.s32 %s10, %s17
    %p108 = scmp.eq.s32.totalorder %s107, 0
    %s110 = sadd.s32 %s109, 1
    %s111 = scalar_select %p108, %s109, %s110
    %p114 = pneg %p108
    %p115 = scmp.eq.s32.totalorder %s10, 1
    %p116 = por %p114, %p115
    %p117 = scmp.ne.s32.totalorder %s109, %s112
    %p118 = scmp.eq.s32.totalorder %s10, 0
    %p119 = por %p117, %p118
    %p120 = scmp.ne.s32.totalorder %s109, %s112
    %p121 = scmp.eq.s32.totalorder %s15, 1
    %p122 = por %p120, %p121
    %p123 = scmp.ne.s32.totalorder %s112, %s113
    %p124 = scmp.eq.s32.totalorder %s15, 0
    %p125 = por %p123, %p124
    %p126 = scmp.ne.s32.totalorder %s112, %s113
    %p127 = scmp.eq.s32.totalorder %s16, 1
    %p128 = por %p126, %p127
    %p130 = scmp.ne.s32.totalorder %s113, %s129
    %p131 = scmp.eq.s32.totalorder %s16, 0
    %p132 = por %p130, %p131
    %p133 = scmp.le.s32.totalorder 1, %s10
    %p134 = scmp.lt.s32.totalorder %s10, 3
    %p135 = pnand %p133, %p134
    %p136 = pneg %p135
    // Predicated region
    $region9: #{con_bn_relu_2d.3} parent=5 // pred_check
      _
    $region10: #{con_bn_relu_2d.3} parent=5 // pred_check_branch
      %138 = sbr.rel (%p135) target = $region12
    $region11: #{con_bn_relu_2d.3} parent=5 // pred_region
      %s139 = ssub.s32 %s10, 1
      // Predicated region
      $region13: #{con_bn_relu_2d.3} parent=11 // pred_check
        %p140 = pneg %p57
      $region14: #{con_bn_relu_2d.3} parent=11 // pred_check_branch
        %142 = sbr.rel (%p140) target = $region16
      $region15: #{con_bn_relu_2d.3} parent=11 // pred_region
        _
      $region16: #{con_bn_relu_2d.3} parent=11 // pred_fallthru
        _
      // Predicated region
      $region17: #{con_bn_relu_2d.3} parent=11 // pred_check
        %p143 = pneg %p78
      $region18: #{con_bn_relu_2d.3} parent=11 // pred_check_branch
        %145 = sbr.rel (%p143) target = $region20
      $region19: #{con_bn_relu_2d.3} parent=11 // pred_region
        _
      $region20: #{con_bn_relu_2d.3} parent=11 // pred_fallthru
        _
      // Predicated region
      $region21: #{con_bn_relu_2d.3} parent=11 // pred_check
        %p146 = pneg %p99
      $region22: #{con_bn_relu_2d.3} parent=11 // pred_check_branch
        %148 = sbr.rel (%p146) target = $region24
      $region23: #{con_bn_relu_2d.3} parent=11 // pred_region
        _
      $region24: #{con_bn_relu_2d.3} parent=11 // pred_fallthru
        _
    $region12: #{con_bn_relu_2d.3} parent=5 // pred_fallthru
      _
    %p149 = scmp.lt.s32.totalorder %s10, 2
    // Predicated region
    $region25: #{con_bn_relu_2d.3} parent=5 // pred_check
      %p150 = pneg %p149
    $region26: #{con_bn_relu_2d.3} parent=5 // pred_check_branch
      %152 = sbr.rel (%p150) target = $region28
    $region27: #{con_bn_relu_2d.3} parent=5 // pred_region
      // Predicated region
      $region29: #{con_bn_relu_2d.3} parent=27 // pred_check
        %p153 = pneg %p30
      $region30: #{con_bn_relu_2d.3} parent=27 // pred_check_branch
        %155 = sbr.rel (%p153) target = $region32
      $region31: #{con_bn_relu_2d.3} parent=27 // pred_region
        %s156 = smul.u32 32, %s10
        %p157 = scmp.lt.s32.totalorder %s156, 63
        %s158 = scalar_select %p157, %s156, 63
        %s159 = smul.addr %s158, 4
        %s160 = scalar_lea.vmem %s0, %s159
        %s161 = smul.u32 32, %s10
      $region32: #{con_bn_relu_2d.3} parent=27 // pred_fallthru
        _
    $region28: #{con_bn_relu_2d.3} parent=5 // pred_fallthru
      _
    %p162 = scmp.le.s32.totalorder 1, %s10
    %p163 = scmp.lt.s32.totalorder %s10, 3
    %p164 = pnand %p162, %p163
    %p165 = pneg %p164
    // Predicated region
    $region33: #{con_bn_relu_2d.3} parent=5 // pred_check
      _
    $region34: #{con_bn_relu_2d.3} parent=5 // pred_check_branch
      %167 = sbr.rel (%p164) target = $region36
    $region35: #{con_bn_relu_2d.3} parent=5 // pred_region
      %s168 = ssub.s32 %s10, 1
      %s169 = smul.u32 32, %s15
      %p170 = scmp.lt.s32.totalorder %s169, 63
      %s171 = scalar_select %p170, %s169, 63
      %s172 = smul.addr %s171, 4
      %s173 = scalar_lea.vmem %s0, %s172
      %p174 = pneg %p36
      %p175 = pneg %p33
      %p176 = pneg %p57
      %p177 = pneg %p54
      %p178 = pneg %p78
      %p179 = pneg %p75
      %p180 = pneg %p99
      %p181 = pneg %p96
      %p182 = pneg %p125
      %p183 = pneg %p122
      %s184 = smul.u32 32, %s15
      %p185 = scmp.lt.s32.totalorder %s184, 63
      %s186 = scalar_select %p185, %s184, 63
      %s187 = smul.addr %s186, 8
      %s188 = scalar_lea.vmem %s4, %s187
      %s189 = smul.u32 32, %s15
      %p190 = scmp.lt.s32.totalorder %s189, 63
      %s191 = scalar_select %p190, %s189, 63
      %s192 = smul.addr %s191, 4
      %s193 = scalar_lea.vmem %s0, %s192
      %s194 = smul.u32 32, %s15
      %s195 = smul.u32 32, %s15
      %p196 = scmp.lt.s32.totalorder %s195, 63
      %s197 = scalar_select %p196, %s195, 63
      %s198 = smul.addr %s197, 8
      %s199 = scalar_lea.vmem %s4, %s198
      %s200 = smul.u32 32, %s15
      %v202 = vld [vmem:[%s193] sm:$0xf]
      %v203 = vld [vmem:[%s193 + $0x4] sm:$0xf]
      %v204 = vld [vmem:[%s193 + $0x8] sm:$0xf]
      %v205 = vld [vmem:[%s193 + $0xc] sm:$0xf]
      %v206 = vld [vmem:[%s193 + $0x10] sm:$0xf]
      %v207 = vld [vmem:[%s193 + $0x14] sm:$0xf]
      %v208 = vld [vmem:[%s193 + $0x18] sm:$0xf]
      %v209 = vld [vmem:[%s193 + $0x1c] sm:$0xf]
      %v210 = vld [vmem:[%s193 + $0x20] sm:$0xf]
      %v211 = vld [vmem:[%s193 + $0x24] sm:$0xf]
      %v212 = vld [vmem:[%s193 + $0x28] sm:$0xf]
      %v213 = vld [vmem:[%s193 + $0x2c] sm:$0xf]
      %v214 = vld [vmem:[%s193 + $0x30] sm:$0xf]
      %v215 = vld [vmem:[%s193 + $0x34] sm:$0xf]
      %v216 = vld [vmem:[%s193 + $0x38] sm:$0xf]
      %v217 = vld [vmem:[%s193 + $0x3c] sm:$0xf]
      %v218 = vld [vmem:[%s193 + $0x40] sm:$0xf]
      %v219 = vld [vmem:[%s193 + $0x44] sm:$0xf]
      %v220 = vld [vmem:[%s193 + $0x48] sm:$0xf]
      %v221 = vld [vmem:[%s193 + $0x4c] sm:$0xf]
      %v222 = vld [vmem:[%s193 + $0x50] sm:$0xf]
      %v223 = vld [vmem:[%s193 + $0x54] sm:$0xf]
      %v224 = vld [vmem:[%s193 + $0x58] sm:$0xf]
      %v225 = vld [vmem:[%s193 + $0x5c] sm:$0xf]
      %v226 = vld [vmem:[%s193 + $0x60] sm:$0xf]
      %v227 = vld [vmem:[%s193 + $0x64] sm:$0xf]
      %v228 = vld [vmem:[%s193 + $0x68] sm:$0xf]
      %v229 = vld [vmem:[%s193 + $0x6c] sm:$0xf]
      %v230 = vld [vmem:[%s193 + $0x70] sm:$0xf]
      %v231 = vld [vmem:[%s193 + $0x74] sm:$0xf]
      %v232 = vld [vmem:[%s193 + $0x78] sm:$0xf]
      %v233 = vld [vmem:[%s193 + $0x7c] sm:$0xf]
      %v234 = vld [vmem:[%s1] sm:$0xf]
      %v235 = vld [vmem:[%s1 + $0x4] sm:$0xf]
      %v236 = vld [vmem:[%s1 + $0x8] sm:$0xf]
      %v237 = vld [vmem:[%s1 + $0xc] sm:$0xf]
      %v238 = vld [vmem:[%s1 + $0x10] sm:$0x3]
      %v271 = vunpack.c.l.b16 %v202
      %v272 = vunpack.c.l.b16 %v203
      %v273 = vunpack.c.l.b16 %v204
      %v274 = vunpack.c.l.b16 %v205
      %v275 = vunpack.c.l.b16 %v206
      %v276 = vunpack.c.l.b16 %v207
      %v277 = vunpack.c.l.b16 %v208
      %v278 = vunpack.c.l.b16 %v209
      %v279 = vunpack.c.l.b16 %v210
      %v280 = vunpack.c.l.b16 %v211
      %v281 = vunpack.c.l.b16 %v212
      %v282 = vunpack.c.l.b16 %v213
      %v283 = vunpack.c.l.b16 %v214
      %v284 = vunpack.c.l.b16 %v215
      %v285 = vunpack.c.l.b16 %v216
      %v286 = vunpack.c.l.b16 %v217
      %v287 = vunpack.c.l.b16 %v218
      %v288 = vunpack.c.l.b16 %v219
      %v289 = vunpack.c.l.b16 %v220
      %v290 = vunpack.c.l.b16 %v221
      %v291 = vunpack.c.l.b16 %v222
      %v292 = vunpack.c.l.b16 %v223
      %v293 = vunpack.c.l.b16 %v224
      %v294 = vunpack.c.l.b16 %v225
      %v295 = vunpack.c.l.b16 %v226
      %v296 = vunpack.c.l.b16 %v227
      %v297 = vunpack.c.l.b16 %v228
      %v298 = vunpack.c.l.b16 %v229
      %v299 = vunpack.c.l.b16 %v230
      %v300 = vunpack.c.l.b16 %v231
      %v301 = vunpack.c.l.b16 %v232
      %v302 = vunpack.c.l.b16 %v233
      %v303 = vpack.c.b16 %v272, %v271
      %v304 = vpack.c.b16 %v274, %v273
      %v305 = vpack.c.b16 %v276, %v275
      %v306 = vpack.c.b16 %v278, %v277
      %v307 = vpack.c.b16 %v280, %v279
      %v308 = vpack.c.b16 %v282, %v281
      %v309 = vpack.c.b16 %v284, %v283
      %v310 = vpack.c.b16 %v286, %v285
      %v311 = vpack.c.b16 %v288, %v287
      %v312 = vpack.c.b16 %v290, %v289
      %v313 = vpack.c.b16 %v292, %v291
      %v314 = vpack.c.b16 %v294, %v293
      %v315 = vpack.c.b16 %v296, %v295
      %v316 = vpack.c.b16 %v298, %v297
      %v317 = vpack.c.b16 %v300, %v299
      %v318 = vpack.c.b16 %v302, %v301
      %v324 = vunpack.c.l.b16 %v234
      %v325 = vunpack.c.l.b16 %v235
      %v326 = vunpack.c.l.b16 %v236
      %v327 = vunpack.c.l.b16 %v237
      %v328 = vunpack.c.l.b16 %v238
      %v329 = vpack.c.b16 %v325, %v324
      %v330 = vpack.c.b16 %v327, %v326
      %v331 = vpack.c.b16 %v328, %v328
      %vm334 = vcmask 293888
      %v336 = vsel %vm334, %v303, 0
      %v339 = vsel %vm334, %v304, 0
      %v342 = vsel %vm334, %v305, 0
      %v345 = vsel %vm334, %v306, 0
      %v348 = vsel %vm334, %v307, 0
      %v351 = vsel %vm334, %v308, 0
      %v354 = vsel %vm334, %v309, 0
      %v357 = vsel %vm334, %v310, 0
      %v360 = vsel %vm334, %v311, 0
      %v363 = vsel %vm334, %v312, 0
      %v366 = vsel %vm334, %v313, 0
      %v369 = vsel %vm334, %v314, 0
      %v372 = vsel %vm334, %v315, 0
      %v375 = vsel %vm334, %v316, 0
      %v378 = vsel %vm334, %v317, 0
      %v381 = vsel %vm334, %v318, 0
      %vm383 = vcmask 1041408
      %v385 = vsel %vm383, %v331, 0
      %387 = vmatprep.subr.bf16.mxu0 0
      %388 = vmatpush1.bf16.msra.mxu0 %v329
      %389 = vmatprep.subr.bf16.mxu0 0
      %390 = vmatpush1.bf16.msra.mxu0 %v330
      %391 = vmatprep.subr.bf16.mxu0 0
      %392 = vmatpush1.bf16.msra.mxu0 %v385
      %393 = vmatprep.subr.bf16.mxu0 0
      %394 = vmatpush1.bf16.msra.mxu0 0
      %395 = vmatprep.subr.bf16.mxu0 0
      %396 = vmatpush1.bf16.msra.mxu0 0
      %397 = vmatprep.subr.bf16.mxu0 0
      %398 = vmatpush1.bf16.msra.mxu0 0
      %399 = vmatprep.subr.bf16.mxu0 0
      %400 = vmatpush1.bf16.msra.mxu0 0
      %401 = vmatprep.subr.bf16.mxu0 0
      %402 = vmatpush1.bf16.msra.mxu0 0
      %403 = vmatprep.subr.bf16.mxu0 0
      %404 = vmatpush1.bf16.msra.mxu0 0
      %405 = vmatprep.subr.bf16.mxu0 0
      %406 = vmatpush1.bf16.msra.mxu0 0
      %407 = vmatprep.subr.bf16.mxu0 0
      %408 = vmatpush1.bf16.msra.mxu0 0
      %409 = vmatprep.subr.bf16.mxu0 0
      %410 = vmatpush1.bf16.msra.mxu0 0
      %411 = vmatprep.subr.bf16.mxu0 0
      %412 = vmatpush1.bf16.msra.mxu0 0
      %413 = vmatprep.subr.bf16.mxu0 0
      %414 = vmatpush1.bf16.msra.mxu0 0
      %415 = vmatprep.subr.bf16.mxu0 0
      %416 = vmatpush1.bf16.msra.mxu0 0
      %417 = vmatprep.subr.bf16.mxu0 0
      %418 = vmatpush1.bf16.msra.mxu0 0
      %419 = vmatprep.mubr.bf16.mxu0 0
      %420 = vmatmul.mubr.bf16.gmra.mrb[0].mxu0 %v336
      %v421 = vpop.f32.mrb[0].mxu0
      %v422 = vadd.f32 0.0, %v421
      %v423 = vpop.f32.mrb[0].mxu0
      %v424 = vpop.f32.mrb[0].mxu0
      %v425 = vadd.f32 0.0, %v424
      %v426 = vpop.f32.mrb[0].mxu0
      %427 = vmatprep.mubr.bf16.mxu0 0
      %428 = vmatmul.mubr.bf16.gmra.mrb[0].mxu0 %v339
      %v429 = vpop.f32.mrb[0].mxu0
      %v430 = vadd.f32 0.0, %v429
      %v431 = vpop.f32.mrb[0].mxu0
      %v432 = vpop.f32.mrb[0].mxu0
      %v433 = vadd.f32 0.0, %v432
      %v434 = vpop.f32.mrb[0].mxu0
      %435 = vmatprep.mubr.bf16.mxu0 0
      %436 = vmatmul.mubr.bf16.gmra.mrb[0].mxu0 %v342
      %v437 = vpop.f32.mrb[0].mxu0
      %v438 = vadd.f32 0.0, %v437
      %v439 = vpop.f32.mrb[0].mxu0
      %v440 = vpop.f32.mrb[0].mxu0
      %v441 = vadd.f32 0.0, %v440
      %v442 = vpop.f32.mrb[0].mxu0
      %443 = vmatprep.mubr.bf16.mxu0 0
      %444 = vmatmul.mubr.bf16.gmra.mrb[0].mxu0 %v345
      %v445 = vpop.f32.mrb[0].mxu0
      %v446 = vadd.f32 0.0, %v445
      %v447 = vpop.f32.mrb[0].mxu0
      %v448 = vpop.f32.mrb[0].mxu0
      %v449 = vadd.f32 0.0, %v448
      %v450 = vpop.f32.mrb[0].mxu0
      %451 = vmatprep.mubr.bf16.mxu0 0
      %452 = vmatmul.mubr.bf16.gmra.mrb[0].mxu0 %v348
      %v453 = vpop.f32.mrb[0].mxu0
      %v454 = vadd.f32 0.0, %v453
      %v455 = vpop.f32.mrb[0].mxu0
      %v456 = vpop.f32.mrb[0].mxu0
      %v457 = vadd.f32 0.0, %v456
      %v458 = vpop.f32.mrb[0].mxu0
      %459 = vmatprep.mubr.bf16.mxu0 0
      %460 = vmatmul.mubr.bf16.gmra.mrb[0].mxu0 %v351
      %v461 = vpop.f32.mrb[0].mxu0
      %v462 = vadd.f32 0.0, %v461
      %v463 = vpop.f32.mrb[0].mxu0
      %v464 = vpop.f32.mrb[0].mxu0
      %v465 = vadd.f32 0.0, %v464
      %v466 = vpop.f32.mrb[0].mxu0
      %467 = vmatprep.mubr.bf16.mxu0 0
      %468 = vmatmul.mubr.bf16.gmra.mrb[0].mxu0 %v354
      %v469 = vpop.f32.mrb[0].mxu0
      %v470 = vadd.f32 0.0, %v469
      %v471 = vpop.f32.mrb[0].mxu0
      %v472 = vpop.f32.mrb[0].mxu0
      %v473 = vadd.f32 0.0, %v472
      %v474 = vpop.f32.mrb[0].mxu0
      %475 = vmatprep.mubr.bf16.mxu0 0
      %476 = vmatmul.mubr.bf16.gmra.mrb[0].mxu0 %v357
      %v477 = vpop.f32.mrb[0].mxu0
      %v478 = vadd.f32 0.0, %v477
      %v479 = vpop.f32.mrb[0].mxu0
      %v480 = vpop.f32.mrb[0].mxu0
      %v481 = vadd.f32 0.0, %v480
      %v482 = vpop.f32.mrb[0].mxu0
      %483 = vmatprep.mubr.bf16.mxu0 0
      %484 = vmatmul.mubr.bf16.gmra.mrb[0].mxu0 %v360
      %v485 = vpop.f32.mrb[0].mxu0
      %v486 = vadd.f32 0.0, %v485
      %v487 = vpop.f32.mrb[0].mxu0
      %v488 = vpop.f32.mrb[0].mxu0
      %v489 = vadd.f32 0.0, %v488
      %v490 = vpop.f32.mrb[0].mxu0
      %491 = vmatprep.mubr.bf16.mxu0 0
      %492 = vmatmul.mubr.bf16.gmra.mrb[0].mxu0 %v363
      %v493 = vpop.f32.mrb[0].mxu0
      %v494 = vadd.f32 0.0, %v493
      %v495 = vpop.f32.mrb[0].mxu0
      %v496 = vpop.f32.mrb[0].mxu0
      %v497 = vadd.f32 0.0, %v496
      %v498 = vpop.f32.mrb[0].mxu0
      %499 = vmatprep.mubr.bf16.mxu0 0
      %500 = vmatmul.mubr.bf16.gmra.mrb[0].mxu0 %v366
      %v501 = vpop.f32.mrb[0].mxu0
      %v502 = vadd.f32 0.0, %v501
      %v503 = vpop.f32.mrb[0].mxu0
      %v504 = vpop.f32.mrb[0].mxu0
      %v505 = vadd.f32 0.0, %v504
      %v506 = vpop.f32.mrb[0].mxu0
      %507 = vmatprep.mubr.bf16.mxu0 0
      %508 = vmatmul.mubr.bf16.gmra.mrb[0].mxu0 %v369
      %v509 = vpop.f32.mrb[0].mxu0
      %v510 = vadd.f32 0.0, %v509
      %v511 = vpop.f32.mrb[0].mxu0
      %v512 = vpop.f32.mrb[0].mxu0
      %v513 = vadd.f32 0.0, %v512
      %v514 = vpop.f32.mrb[0].mxu0
      %515 = vmatprep.mubr.bf16.mxu0 0
      %516 = vmatmul.mubr.bf16.gmra.mrb[0].mxu0 %v372
      %v517 = vpop.f32.mrb[0].mxu0
      %v518 = vadd.f32 0.0, %v517
      %v519 = vpop.f32.mrb[0].mxu0
      %v520 = vpop.f32.mrb[0].mxu0
      %v521 = vadd.f32 0.0, %v520
      %v522 = vpop.f32.mrb[0].mxu0
      %523 = vmatprep.mubr.bf16.mxu0 0
      %524 = vmatmul.mubr.bf16.gmra.mrb[0].mxu0 %v375
      %v525 = vpop.f32.mrb[0].mxu0
      %v526 = vadd.f32 0.0, %v525
      %v527 = vpop.f32.mrb[0].mxu0
      %v528 = vpop.f32.mrb[0].mxu0
      %v529 = vadd.f32 0.0, %v528
      %v530 = vpop.f32.mrb[0].mxu0
      %531 = vmatprep.mubr.bf16.mxu0 0
      %532 = vmatmul.mubr.bf16.gmra.mrb[0].mxu0 %v378
      %v533 = vpop.f32.mrb[0].mxu0
      %v534 = vadd.f32 0.0, %v533
      %v535 = vpop.f32.mrb[0].mxu0
      %v536 = vpop.f32.mrb[0].mxu0
      %v537 = vadd.f32 0.0, %v536
      %v538 = vpop.f32.mrb[0].mxu0
      %539 = vmatprep.mubr.bf16.mxu0 0
      %540 = vmatmul.mubr.bf16.gmra.mrb[0].mxu0 %v381
      %v541 = vpop.f32.mrb[0].mxu0
      %v542 = vadd.f32 0.0, %v541
      %v543 = vpop.f32.mrb[0].mxu0
      %v544 = vpop.f32.mrb[0].mxu0
      %v545 = vadd.f32 0.0, %v544
      %v546 = vpop.f32.mrb[0].mxu0
      %547 = vdwg.mxu0
      %v548 = vld [vmem:[%s2] sm:$0x1]
      %v550 = vlaneseq
      %v551 = vshrl.u32 %v550, 7
      %v552 = vsub.s32 0, %v551
      %v553 = vrot.slane %v548, %v552
      %v555 = vmul.f32 %v422, %v553
      %v556 = vmul.f32 %v425, %v553
      %v557 = vmul.f32 %v430, %v553
      %v558 = vmul.f32 %v433, %v553
      %v559 = vmul.f32 %v438, %v553
      %v560 = vmul.f32 %v441, %v553
      %v561 = vmul.f32 %v446, %v553
      %v562 = vmul.f32 %v449, %v553
      %v563 = vmul.f32 %v454, %v553
      %v564 = vmul.f32 %v457, %v553
      %v565 = vmul.f32 %v462, %v553
      %v566 = vmul.f32 %v465, %v553
      %v567 = vmul.f32 %v470, %v553
      %v568 = vmul.f32 %v473, %v553
      %v569 = vmul.f32 %v478, %v553
      %v570 = vmul.f32 %v481, %v553
      %v571 = vmul.f32 %v486, %v553
      %v572 = vmul.f32 %v489, %v553
      %v573 = vmul.f32 %v494, %v553
      %v574 = vmul.f32 %v497, %v553
      %v575 = vmul.f32 %v502, %v553
      %v576 = vmul.f32 %v505, %v553
      %v577 = vmul.f32 %v510, %v553
      %v578 = vmul.f32 %v513, %v553
      %v579 = vmul.f32 %v518, %v553
      %v580 = vmul.f32 %v521, %v553
      %v581 = vmul.f32 %v526, %v553
      %v582 = vmul.f32 %v529, %v553
      %v583 = vmul.f32 %v534, %v553
      %v584 = vmul.f32 %v537, %v553
      %v585 = vmul.f32 %v542, %v553
      %v586 = vmul.f32 %v545, %v553
      %v587 = vld [vmem:[%s3] sm:$0x1]
      %v589 = vlaneseq
      %v590 = vshrl.u32 %v589, 7
      %v591 = vsub.s32 0, %v590
      %v592 = vrot.slane %v587, %v591
      %v594 = vadd.f32 %v555, %v592
      %v595 = vadd.f32 %v556, %v592
      %v596 = vadd.f32 %v557, %v592
      %v597 = vadd.f32 %v558, %v592
      %v598 = vadd.f32 %v559, %v592
      %v599 = vadd.f32 %v560, %v592
      %v600 = vadd.f32 %v561, %v592
      %v601 = vadd.f32 %v562, %v592
      %v602 = vadd.f32 %v563, %v592
      %v603 = vadd.f32 %v564, %v592
      %v604 = vadd.f32 %v565, %v592
      %v605 = vadd.f32 %v566, %v592
      %v606 = vadd.f32 %v567, %v592
      %v607 = vadd.f32 %v568, %v592
      %v608 = vadd.f32 %v569, %v592
      %v609 = vadd.f32 %v570, %v592
      %v610 = vadd.f32 %v571, %v592
      %v611 = vadd.f32 %v572, %v592
      %v612 = vadd.f32 %v573, %v592
      %v613 = vadd.f32 %v574, %v592
      %v614 = vadd.f32 %v575, %v592
      %v615 = vadd.f32 %v576, %v592
      %v616 = vadd.f32 %v577, %v592
      %v617 = vadd.f32 %v578, %v592
      %v618 = vadd.f32 %v579, %v592
      %v619 = vadd.f32 %v580, %v592
      %v620 = vadd.f32 %v581, %v592
      %v621 = vadd.f32 %v582, %v592
      %v622 = vadd.f32 %v583, %v592
      %v623 = vadd.f32 %v584, %v592
      %v624 = vadd.f32 %v585, %v592
      %v625 = vadd.f32 %v586, %v592
      %v626 = vmax.f32 %v594, 0.0
      %v627 = vmax.f32 %v595, 0.0
      %v628 = vmax.f32 %v596, 0.0
      %v629 = vmax.f32 %v597, 0.0
      %v630 = vmax.f32 %v598, 0.0
      %v631 = vmax.f32 %v599, 0.0
      %v632 = vmax.f32 %v600, 0.0
      %v633 = vmax.f32 %v601, 0.0
      %v634 = vmax.f32 %v602, 0.0
      %v635 = vmax.f32 %v603, 0.0
      %v636 = vmax.f32 %v604, 0.0
      %v637 = vmax.f32 %v605, 0.0
      %v638 = vmax.f32 %v606, 0.0
      %v639 = vmax.f32 %v607, 0.0
      %v640 = vmax.f32 %v608, 0.0
      %v641 = vmax.f32 %v609, 0.0
      %v642 = vmax.f32 %v610, 0.0
      %v643 = vmax.f32 %v611, 0.0
      %v644 = vmax.f32 %v612, 0.0
      %v645 = vmax.f32 %v613, 0.0
      %v646 = vmax.f32 %v614, 0.0
      %v647 = vmax.f32 %v615, 0.0
      %v648 = vmax.f32 %v616, 0.0
      %v649 = vmax.f32 %v617, 0.0
      %v650 = vmax.f32 %v618, 0.0
      %v651 = vmax.f32 %v619, 0.0
      %v652 = vmax.f32 %v620, 0.0
      %v653 = vmax.f32 %v621, 0.0
      %v654 = vmax.f32 %v622, 0.0
      %v655 = vmax.f32 %v623, 0.0
      %v656 = vmax.f32 %v624, 0.0
      %v657 = vmax.f32 %v625, 0.0
      %vm658 = vcmask 64512
      %659 = vst.msk [vmem:[%s199] sm:$0xff] %vm658, %v626
      %660 = vst.msk [vmem:[%s199 + $0x8] sm:$0xff] %vm658, %v627
      %661 = vst.msk [vmem:[%s199 + $0x10] sm:$0xff] %vm658, %v628
      %662 = vst.msk [vmem:[%s199 + $0x18] sm:$0xff] %vm658, %v629
      %663 = vst.msk [vmem:[%s199 + $0x20] sm:$0xff] %vm658, %v630
      %664 = vst.msk [vmem:[%s199 + $0x28] sm:$0xff] %vm658, %v631
      %665 = vst.msk [vmem:[%s199 + $0x30] sm:$0xff] %vm658, %v632
      %666 = vst.msk [vmem:[%s199 + $0x38] sm:$0xff] %vm658, %v633
      %667 = vst.msk [vmem:[%s199 + $0x40] sm:$0xff] %vm658, %v634
      %668 = vst.msk [vmem:[%s199 + $0x48] sm:$0xff] %vm658, %v635
      %669 = vst.msk [vmem:[%s199 + $0x50] sm:$0xff] %vm658, %v636
      %670 = vst.msk [vmem:[%s199 + $0x58] sm:$0xff] %vm658, %v637
      %671 = vst.msk [vmem:[%s199 + $0x60] sm:$0xff] %vm658, %v638
      %672 = vst.msk [vmem:[%s199 + $0x68] sm:$0xff] %vm658, %v639
      %673 = vst.msk [vmem:[%s199 + $0x70] sm:$0xff] %vm658, %v640
      %674 = vst.msk [vmem:[%s199 + $0x78] sm:$0xff] %vm658, %v641
      %675 = vst.msk [vmem:[%s199 + $0x80] sm:$0xff] %vm658, %v642
      %676 = vst.msk [vmem:[%s199 + $0x88] sm:$0xff] %vm658, %v643
      %677 = vst.msk [vmem:[%s199 + $0x90] sm:$0xff] %vm658, %v644
      %678 = vst.msk [vmem:[%s199 + $0x98] sm:$0xff] %vm658, %v645
      %679 = vst.msk [vmem:[%s199 + $0xa0] sm:$0xff] %vm658, %v646
      %680 = vst.msk [vmem:[%s199 + $0xa8] sm:$0xff] %vm658, %v647
      %681 = vst.msk [vmem:[%s199 + $0xb0] sm:$0xff] %vm658, %v648
      %682 = vst.msk [vmem:[%s199 + $0xb8] sm:$0xff] %vm658, %v649
      %683 = vst.msk [vmem:[%s199 + $0xc0] sm:$0xff] %vm658, %v650
      %684 = vst.msk [vmem:[%s199 + $0xc8] sm:$0xff] %vm658, %v651
      %685 = vst.msk [vmem:[%s199 + $0xd0] sm:$0xff] %vm658, %v652
      %686 = vst.msk [vmem:[%s199 + $0xd8] sm:$0xff] %vm658, %v653
      %687 = vst.msk [vmem:[%s199 + $0xe0] sm:$0xff] %vm658, %v654
      %688 = vst.msk [vmem:[%s199 + $0xe8] sm:$0xff] %vm658, %v655
      %689 = vst.msk [vmem:[%s199 + $0xf0] sm:$0xff] %vm658, %v656
      %690 = vst.msk [vmem:[%s199 + $0xf8] sm:$0xff] %vm658, %v657
      %s691 = smul.u32 32, %s15
      %p692 = scmp.lt.s32.totalorder %s691, 63
      %s693 = scalar_select %p692, %s691, 63
      %s694 = smul.addr %s693, 8
      %s695 = scalar_lea.vmem %s4, %s694
      // Predicated region
      $region37: #{con_bn_relu_2d.3} parent=35 // pred_check
        %p696 = pneg %p122
      $region38: #{con_bn_relu_2d.3} parent=35 // pred_check_branch
        %698 = sbr.rel (%p696) target = $region40
      $region39: #{con_bn_relu_2d.3} parent=35 // pred_region
        %s699 = smul.u32 32, %s15
      $region40: #{con_bn_relu_2d.3} parent=35 // pred_fallthru
        _
    $region36: #{con_bn_relu_2d.3} parent=5 // pred_fallthru
      _
    %p700 = scmp.le.s32.totalorder 2, %s10
    // Predicated region
    $region41: #{con_bn_relu_2d.3} parent=5 // pred_check
      %p701 = pneg %p700
    $region42: #{con_bn_relu_2d.3} parent=5 // pred_check_branch
      %703 = sbr.rel (%p701) target = $region44
    $region43: #{con_bn_relu_2d.3} parent=5 // pred_region
      %s704 = ssub.s32 %s10, 2
      // Predicated region
      $region45: #{con_bn_relu_2d.3} parent=43 // pred_check
        %p705 = pneg %p128
      $region46: #{con_bn_relu_2d.3} parent=43 // pred_check_branch
        %707 = sbr.rel (%p705) target = $region48
      $region47: #{con_bn_relu_2d.3} parent=43 // pred_region
        %s708 = smul.u32 32, %s16
        %p709 = scmp.lt.s32.totalorder %s708, 63
        %s710 = scalar_select %p709, %s708, 63
        %s711 = smul.addr %s710, 8
        %s712 = scalar_lea.vmem %s4, %s711
      $region48: #{con_bn_relu_2d.3} parent=43 // pred_fallthru
        _
    $region44: #{con_bn_relu_2d.3} parent=5 // pred_fallthru
      _
  $region6: #{con_bn_relu_2d.3} parent=0 // loop_footer
    %s14 = sadd.s32 1, %s10
  $region7: #{con_bn_relu_2d.3} parent=0 // loop_footer_branch
    %9 = sbr.rel target = $region3
  $region8: #{con_bn_relu_2d.3} parent=0 // loop_exit
    _

</llo_original>
